<compile_context>
chip_gen: v5e
topology: v5e:2x2
jax: 0.10.0
libtpu: 0.0.40
codegen_flags: <defaults>
</compile_context>

<pallas_src>
import functools

import jax
import jax.numpy as jnp
from jax.experimental import pallas as pl
from jax.experimental.pallas import tpu as pltpu


def _round_up(n, m):
    return (n + m - 1) // m * m


def _a2c_value_kernel(x_ref, w1_ref, b1_ref, w2_ref, b2_ref, w3_ref, b3_ref, o_ref):
    # x arrives as bf16 (HBM-traffic optimization); compute in f32.
    x = x_ref[...].astype(jnp.float32)                      # (TB, D)

    h1 = jnp.dot(x, w1_ref[...], preferred_element_type=jnp.float32)
    h1 = jnp.maximum(h1 + b1_ref[...], 0.0)                 # (TB, H)

    h2 = jnp.dot(h1, w2_ref[...], preferred_element_type=jnp.float32)
    h2 = jnp.maximum(h2 + b2_ref[...], 0.0)                 # (TB, H)

    # Final layer computed transposed so the result is lane-dense:
    # (1, H) @ (H, TB) -> (1, TB); batch lives in the lane axis.
    out = jnp.dot(w3_ref[...], h2.T, preferred_element_type=jnp.float32)
    o_ref[...] = out + b3_ref[0, 0]                         # scalar bias from SMEM


@functools.partial(jax.jit, static_argnames=("block_b",))
def a2c_value_forward(x, w1, b1, w2, b2, w3, b3, *, block_b=4096):
    """Pallas forward pass of the A2C critic.

    x:  (B, D);  w1: (D, H), b1: (1, H);  w2: (H, H), b2: (1, H);
    w3: (H, 1), b3: (1, 1).   Returns (B, 1) float32.
    """
    B, D = x.shape
    H = w1.shape[1]

    # Batch tile: multiple of 128 so the streamed (TB, D) input block is
    # sublane-aligned and the lane-dense (1, TB) output block satisfies the
    # last-dim-divisible-by-128 rule.
    TB = _round_up(min(block_b, max(B, 1)), 128)
    B_pad = _round_up(B, TB)
    grid = (B_pad // TB,)

    # Only the x stream scales with B -> ship it as bf16 (halves HBM reads).
    xb = x.astype(jnp.bfloat16)
    if B_pad != B:
        xb = jnp.pad(xb, ((0, B_pad - B), (0, 0)))

    w1 = w1.astype(jnp.float32)
    w2 = w2.astype(jnp.float32)
    b1 = b1.astype(jnp.float32).reshape(1, H)
    b2 = b2.astype(jnp.float32).reshape(1, H)
    w3_row = w3.astype(jnp.float32).reshape(1, H)           # (1, H) row for transposed layer 3
    b3 = b3.astype(jnp.float32).reshape(1, 1)

    out_t = pl.pallas_call(
        _a2c_value_kernel,
        out_shape=jax.ShapeDtypeStruct((1, B_pad), jnp.float32),
        grid=grid,
        in_specs=[
            pl.BlockSpec((TB, D), lambda i: (i, 0)),        # x: streamed per grid step
            pl.BlockSpec((D, H), lambda i: (0, 0)),         # weights / biases: constant index
            pl.BlockSpec((1, H), lambda i: (0, 0)),         #   -> VMEM-resident across steps
            pl.BlockSpec((H, H), lambda i: (0, 0)),
            pl.BlockSpec((1, H), lambda i: (0, 0)),
            pl.BlockSpec((1, H), lambda i: (0, 0)),
            pl.BlockSpec(memory_space=pltpu.MemorySpace.SMEM),  # b3 scalar in SMEM
        ],
        out_specs=pl.BlockSpec((1, TB), lambda i: (0, i)),  # lane-dense output blocks
        compiler_params=pltpu.CompilerParams(
            dimension_semantics=("parallel",),              # megacore sharding on v7x
            vmem_limit_bytes=32 * 1024 * 1024,
        ),
    )(xb, w1, b1, w2, b2, w3_row, b3)

    return out_t[0, :B].reshape(B, 1)


def init_params(key, input_dim, hidden_size=32):
    """PyTorch nn.Linear-style init: U(-1/sqrt(fan_in), 1/sqrt(fan_in))."""
    def linear(k, fan_in, fan_out):
        kw, kb = jax.random.split(k)
        bound = 1.0 / jnp.sqrt(float(fan_in))
        w = jax.random.uniform(kw, (fan_in, fan_out), jnp.float32, -bound, bound)
        b = jax.random.uniform(kb, (1, fan_out), jnp.float32, -bound, bound)
        return w, b

    k1, k2, k3 = jax.random.split(key, 3)
    w1, b1 = linear(k1, input_dim, hidden_size)
    w2, b2 = linear(k2, hidden_size, hidden_size)
    w3, b3 = linear(k3, hidden_size, 1)
    return w1, b1, w2, b2, w3, b3


def reference_forward(x, w1, b1, w2, b2, w3, b3):
    """Pure-JAX f32 reference (matches the torch module)."""
    xf = x.astype(jnp.float32)
    h1 = jnp.maximum(xf @ w1 + b1, 0.0)
    h2 = jnp.maximum(h1 @ w2 + b2, 0.0)
    return h2 @ w3 + b3


if __name__ == "__main__":
    key = jax.random.PRNGKey(0)
    k_x, k_p = jax.random.split(key)

    batch = 200          # exercises a 2-step grid with a ragged (padded) last block
    input_dim = 4        # input_shape[0] of the torch module
    hidden_size = 32

    x = jax.random.normal(k_x, (batch, input_dim), dtype=jnp.float32)
    params = init_params(k_p, input_dim, hidden_size)

    out = jax.block_until_ready(a2c_value_forward(x, *params, block_b=128))
    assert out.shape == (batch, 1), out.shape

    # Reference that applies the same bf16 rounding to the x stream (tight check),
    # plus a pure-f32 reference (loose check; bounds the bf16-input deviation).
    x_bf16_rounded = x.astype(jnp.bfloat16).astype(jnp.float32)
    ref_matched = reference_forward(x_bf16_rounded, *params)
    ref_f32 = reference_forward(x, *params)
    assert jnp.allclose(out, ref_matched, atol=1e-3, rtol=1e-3), "mismatch vs bf16-matched reference"
    assert jnp.allclose(out, ref_f32, atol=5e-2, rtol=5e-2), "mismatch vs f32 reference"

    # Also exercise the single-block path (B < TB, default block size).
    out_small = jax.block_until_ready(a2c_value_forward(x[:8], *params))
    assert out_small.shape == (8, 1), out_small.shape
    assert jnp.allclose(out_small, ref_matched[:8], atol=1e-3, rtol=1e-3)

    print("KERNEL_OK")
</pallas_src>

<mosaic_0001>
module attributes {stable_mosaic.version = 11 : i64} {
  func.func @_a2c_value_kernel(%arg0: i32, %arg1: memref<128x4xbf16, #tpu.memory_space<vmem>>, %arg2: memref<4x32xf32, #tpu.memory_space<vmem>>, %arg3: memref<1x32xf32, #tpu.memory_space<vmem>>, %arg4: memref<32x32xf32, #tpu.memory_space<vmem>>, %arg5: memref<1x32xf32, #tpu.memory_space<vmem>>, %arg6: memref<1x32xf32, #tpu.memory_space<vmem>>, %arg7: memref<1x1xf32, #tpu.memory_space<smem>>, %arg8: memref<1x128xf32, #tpu.memory_space<vmem>>) attributes {dimension_semantics = [#tpu.dimension_semantics<parallel>], iteration_bounds = array<i64: 2>, scalar_prefetch = 0 : i64, scratch_operands = 0 : i64, tpu.core_type = #tpu.core_type<tc>, window_params = [{transform_indices = @transform_0, window_bounds = array<i64: 128, 4>}, {pipeline_mode = #tpu.pipeline_mode<synchronous>, transform_indices = @transform_1, window_bounds = array<i64: 4, 32>}, {pipeline_mode = #tpu.pipeline_mode<synchronous>, transform_indices = @transform_2, window_bounds = array<i64: 1, 32>}, {pipeline_mode = #tpu.pipeline_mode<synchronous>, transform_indices = @transform_3, window_bounds = array<i64: 32, 32>}, {pipeline_mode = #tpu.pipeline_mode<synchronous>, transform_indices = @transform_4, window_bounds = array<i64: 1, 32>}, {pipeline_mode = #tpu.pipeline_mode<synchronous>, transform_indices = @transform_5, window_bounds = array<i64: 1, 32>}, {transform_indices = @transform_6, window_bounds = array<i64: 1, 1>}, {transform_indices = @transform_7, window_bounds = array<i64: 1, 128>}]} {
    %c0 = arith.constant 0 : index
    %c0_0 = arith.constant 0 : index
    %0 = vector.load %arg1[%c0, %c0_0] : memref<128x4xbf16, #tpu.memory_space<vmem>>, vector<128x4xbf16>
    %1 = arith.extf %0 : vector<128x4xbf16> to vector<128x4xf32>
    %c0_1 = arith.constant 0 : index
    %c0_2 = arith.constant 0 : index
    %2 = vector.load %arg2[%c0_1, %c0_2] : memref<4x32xf32, #tpu.memory_space<vmem>>, vector<4x32xf32>
    %cst = arith.constant dense<0.000000e+00> : vector<128x32xf32>
    %3 = tpu.matmul %1, %2, %cst {dimension_numbers = #tpu.dot_dimension_numbers<[1], [0], [0], [1], [0, 0, 1, 1], [], []>} : vector<128x4xf32>, vector<4x32xf32>, vector<128x32xf32> -> vector<128x32xf32>
    %c0_3 = arith.constant 0 : index
    %c0_4 = arith.constant 0 : index
    %4 = vector.load %arg3[%c0_3, %c0_4] : memref<1x32xf32, #tpu.memory_space<vmem>>, vector<1x32xf32>
    %5 = vector.broadcast %4 : vector<1x32xf32> to vector<128x32xf32>
    %6 = arith.addf %3, %5 : vector<128x32xf32>
    %cst_5 = arith.constant 0.000000e+00 : f32
    %7 = vector.broadcast %cst_5 : f32 to vector<128x32xf32>
    %8 = arith.maximumf %6, %7 : vector<128x32xf32>
    %c0_6 = arith.constant 0 : index
    %c0_7 = arith.constant 0 : index
    %9 = vector.load %arg4[%c0_6, %c0_7] : memref<32x32xf32, #tpu.memory_space<vmem>>, vector<32x32xf32>
    %cst_8 = arith.constant dense<0.000000e+00> : vector<128x32xf32>
    %10 = tpu.matmul %8, %9, %cst_8 {dimension_numbers = #tpu.dot_dimension_numbers<[1], [0], [0], [1], [0, 0, 1, 1], [], []>} : vector<128x32xf32>, vector<32x32xf32>, vector<128x32xf32> -> vector<128x32xf32>
    %c0_9 = arith.constant 0 : index
    %c0_10 = arith.constant 0 : index
    %11 = vector.load %arg5[%c0_9, %c0_10] : memref<1x32xf32, #tpu.memory_space<vmem>>, vector<1x32xf32>
    %12 = vector.broadcast %11 : vector<1x32xf32> to vector<128x32xf32>
    %13 = arith.addf %10, %12 : vector<128x32xf32>
    %cst_11 = arith.constant 0.000000e+00 : f32
    %14 = vector.broadcast %cst_11 : f32 to vector<128x32xf32>
    %15 = arith.maximumf %13, %14 : vector<128x32xf32>
    %c0_12 = arith.constant 0 : index
    %c0_13 = arith.constant 0 : index
    %16 = vector.load %arg6[%c0_12, %c0_13] : memref<1x32xf32, #tpu.memory_space<vmem>>, vector<1x32xf32>
    %17 = tpu.transpose %15, [1, 0] : vector<128x32xf32> -> vector<32x128xf32>
    %cst_14 = arith.constant dense<0.000000e+00> : vector<1x128xf32>
    %18 = tpu.matmul %16, %17, %cst_14 {dimension_numbers = #tpu.dot_dimension_numbers<[1], [0], [0], [1], [0, 0, 1, 1], [], []>} : vector<1x32xf32>, vector<32x128xf32>, vector<1x128xf32> -> vector<1x128xf32>
    %c0_15 = arith.constant 0 : index
    %c0_16 = arith.constant 0 : index
    %19 = memref.load %arg7[%c0_15, %c0_16] : memref<1x1xf32, #tpu.memory_space<smem>>
    %20 = vector.broadcast %19 : f32 to vector<1x128xf32>
    %21 = arith.addf %18, %20 : vector<1x128xf32>
    %c0_17 = arith.constant 0 : index
    %c0_18 = arith.constant 0 : index
    %22 = vector.load %arg8[%c0_17, %c0_18] : memref<1x128xf32, #tpu.memory_space<vmem>>, vector<1x128xf32>
    tpu.vector_store %arg8[%c0_17, %c0_18], %21 {strides = array<i32>} : memref<1x128xf32, #tpu.memory_space<vmem>>, vector<1x128xf32>,
    return
  }
  func.func @transform_0(%arg0: i32) -> (i32, i32) {
    %c0_i32 = arith.constant 0 : i32
    %c0_i32_0 = arith.constant 0 : i32
    return %arg0, %c0_i32 : i32, i32
  }
  func.func @transform_1(%arg0: i32) -> (i32, i32) {
    %c0_i32 = arith.constant 0 : i32
    %c0_i32_0 = arith.constant 0 : i32
    %c0_i32_1 = arith.constant 0 : i32
    return %c0_i32, %c0_i32_0 : i32, i32
  }
  func.func @transform_2(%arg0: i32) -> (i32, i32) {
    %c0_i32 = arith.constant 0 : i32
    %c0_i32_0 = arith.constant 0 : i32
    %c0_i32_1 = arith.constant 0 : i32
    return %c0_i32, %c0_i32_0 : i32, i32
  }
  func.func @transform_3(%arg0: i32) -> (i32, i32) {
    %c0_i32 = arith.constant 0 : i32
    %c0_i32_0 = arith.constant 0 : i32
    %c0_i32_1 = arith.constant 0 : i32
    return %c0_i32, %c0_i32_0 : i32, i32
  }
  func.func @transform_4(%arg0: i32) -> (i32, i32) {
    %c0_i32 = arith.constant 0 : i32
    %c0_i32_0 = arith.constant 0 : i32
    %c0_i32_1 = arith.constant 0 : i32
    return %c0_i32, %c0_i32_0 : i32, i32
  }
  func.func @transform_5(%arg0: i32) -> (i32, i32) {
    %c0_i32 = arith.constant 0 : i32
    %c0_i32_0 = arith.constant 0 : i32
    %c0_i32_1 = arith.constant 0 : i32
    return %c0_i32, %c0_i32_0 : i32, i32
  }
  func.func @transform_6(%arg0: i32) -> (i32, i32) {
    %c0_i32 = arith.constant 0 : i32
    %c0_i32_0 = arith.constant 0 : i32
    %c0_i32_1 = arith.constant 0 : i32
    return %c0_i32, %c0_i32_0 : i32, i32
  }
  func.func @transform_7(%arg0: i32) -> (i32, i32) {
    %c0_i32 = arith.constant 0 : i32
    %c0_i32_0 = arith.constant 0 : i32
    return %c0_i32, %arg0 : i32, i32
  }
}

</mosaic_0001>

<llo_original>
// kernel: a2c_value_forward.1
$region0: #{a2c_value_forward.1}
  #allocation0 [shape = 'u32[]', space=smem, size = 0x4, offset = 0x4, fixed_abs, tag = 'smem constant byte address 0x4 - core index']
  #allocation1 [shape = 'u32[72,128]{1,0:T(1,128)}', space=vmem, size = 0x9000, scoped, tag = 'internal scratch']
  #allocation2 [shape = 'f32[1,1]{1,0:T(1,128)S(6)}', space=smem, size = 0x200, scoped, tag = 'scoped memory for a2c_value_forward.1']
  %s0 = inlined_call_operand.vmem [shape: bf16[256,4], index: 0, kind: input, shape index: {}]
  %s1 = inlined_call_operand.vmem [shape: f32[4,32], index: 1, kind: input, shape index: {}]
  %s2 = inlined_call_operand.vmem [shape: f32[1,32], index: 2, kind: input, shape index: {}]
  %s3 = inlined_call_operand.vmem [shape: f32[32,32], index: 3, kind: input, shape index: {}]
  %s4 = inlined_call_operand.vmem [shape: f32[1,32], index: 4, kind: input, shape index: {}]
  %s5 = inlined_call_operand.vmem [shape: f32[1,32], index: 5, kind: input, shape index: {}]
  %s6 = inlined_call_operand.<no memory space> [shape: f32[1,1], index: 6, kind: input, shape index: {}]
  %s7 = inlined_call_operand.vmem [shape: f32[1,256], index: 7, kind: output, shape index: {}]
  %s8 = sld [smem:[#allocation0]]
  $region61: #{a2c_value_forward.1} parent=0
    _
  %s10 = ssub.s32 1, %s8
  %s11 = scalar_select 0, %s10, %s8
  %12 = sst [smem:[#allocation2]] %s6
  loop: start=0, step=1, limit=4
  $region2: #{a2c_value_forward.1} parent=0 // loop_pre_header
    _
  $region3: #{a2c_value_forward.1} parent=0 // loop_header
    %s14 = sphi 0, %s18
    %p15 = scmp.ge.s32.totalorder %s14, 4
    %s24 = sphi 0, %s26
    %s27 = sphi 0, %s24
    %s28 = sphi 0, %s27
    %s44 = sphi 0, %s28
    %s48 = sphi 0, %s48
    %s50 = sphi 0, %s48
    %s51 = sphi 0, %s50
    %s65 = sphi 0, %s51
    %s69 = sphi 0, %s69
    %s71 = sphi 0, %s69
    %s72 = sphi 0, %s71
    %s86 = sphi 0, %s72
    %s90 = sphi 0, %s90
    %s92 = sphi 0, %s90
    %s93 = sphi 0, %s92
    %s107 = sphi 0, %s93
    %s111 = sphi 0, %s111
    %s113 = sphi 0, %s111
    %s114 = sphi 0, %s113
    %s128 = sphi 0, %s114
    %s132 = sphi 0, %s132
    %s134 = sphi 0, %s132
    %s135 = sphi 0, %s134
    %s149 = sphi 0, %s135
    %s153 = sphi 0, %s153
    %s155 = sphi 0, %s153
    %s156 = sphi 0, %s155
    %s170 = sphi 0, %s156
    %s176 = sphi 0, %s178
    %s179 = sphi 0, %s176
    %s180 = sphi 0, %s179
    %s196 = sphi 0, %s180
  $region4: #{a2c_value_forward.1} parent=0 // loop_header_branch
    %17 = sbr.rel (%p15) target = $region8
  $region5: #{a2c_value_forward.1} parent=0 // loop_body
    %s19 = ssub.s32 %s14, 1
    %s20 = ssub.s32 %s14, 2
    %s21 = sadd.s32 %s14, 1
    %s22 = ssub.s32 %s14, %s21
    %p23 = scmp.eq.s32.totalorder %s22, 0
    %s25 = sadd.s32 %s24, 1
    %s26 = scalar_select %p23, %s24, %s25
    %p29 = pneg %p23
    %p30 = scmp.eq.s32.totalorder %s14, 1
    %p31 = por %p29, %p30
    %p32 = scmp.ne.s32.totalorder %s24, %s27
    %p33 = scmp.eq.s32.totalorder %s14, 0
    %p34 = por %p32, %p33
    %p35 = scmp.ne.s32.totalorder %s24, %s27
    %p36 = scmp.eq.s32.totalorder %s19, 1
    %p37 = por %p35, %p36
    %p38 = scmp.ne.s32.totalorder %s27, %s28
    %p39 = scmp.eq.s32.totalorder %s19, 0
    %p40 = por %p38, %p39
    %p41 = scmp.ne.s32.totalorder %s27, %s28
    %p42 = scmp.eq.s32.totalorder %s20, 1
    %p43 = por %p41, %p42
    %p45 = scmp.ne.s32.totalorder %s28, %s44
    %p46 = scmp.eq.s32.totalorder %s20, 0
    %p47 = por %p45, %p46
    %s49 = sadd.s32 %s48, 1
    %p52 = scmp.eq.s32.totalorder %s14, 1
    %p53 = scmp.ne.s32.totalorder %s48, %s50
    %p54 = scmp.eq.s32.totalorder %s14, 0
    %p55 = por %p53, %p54
    %p56 = scmp.ne.s32.totalorder %s48, %s50
    %p57 = scmp.eq.s32.totalorder %s19, 1
    %p58 = por %p56, %p57
    %p59 = scmp.ne.s32.totalorder %s50, %s51
    %p60 = scmp.eq.s32.totalorder %s19, 0
    %p61 = por %p59, %p60
    %p62 = scmp.ne.s32.totalorder %s50, %s51
    %p63 = scmp.eq.s32.totalorder %s20, 1
    %p64 = por %p62, %p63
    %p66 = scmp.ne.s32.totalorder %s51, %s65
    %p67 = scmp.eq.s32.totalorder %s20, 0
    %p68 = por %p66, %p67
    %s70 = sadd.s32 %s69, 1
    %p73 = scmp.eq.s32.totalorder %s14, 1
    %p74 = scmp.ne.s32.totalorder %s69, %s71
    %p75 = scmp.eq.s32.totalorder %s14, 0
    %p76 = por %p74, %p75
    %p77 = scmp.ne.s32.totalorder %s69, %s71
    %p78 = scmp.eq.s32.totalorder %s19, 1
    %p79 = por %p77, %p78
    %p80 = scmp.ne.s32.totalorder %s71, %s72
    %p81 = scmp.eq.s32.totalorder %s19, 0
    %p82 = por %p80, %p81
    %p83 = scmp.ne.s32.totalorder %s71, %s72
    %p84 = scmp.eq.s32.totalorder %s20, 1
    %p85 = por %p83, %p84
    %p87 = scmp.ne.s32.totalorder %s72, %s86
    %p88 = scmp.eq.s32.totalorder %s20, 0
    %p89 = por %p87, %p88
    %s91 = sadd.s32 %s90, 1
    %p94 = scmp.eq.s32.totalorder %s14, 1
    %p95 = scmp.ne.s32.totalorder %s90, %s92
    %p96 = scmp.eq.s32.totalorder %s14, 0
    %p97 = por %p95, %p96
    %p98 = scmp.ne.s32.totalorder %s90, %s92
    %p99 = scmp.eq.s32.totalorder %s19, 1
    %p100 = por %p98, %p99
    %p101 = scmp.ne.s32.totalorder %s92, %s93
    %p102 = scmp.eq.s32.totalorder %s19, 0
    %p103 = por %p101, %p102
    %p104 = scmp.ne.s32.totalorder %s92, %s93
    %p105 = scmp.eq.s32.totalorder %s20, 1
    %p106 = por %p104, %p105
    %p108 = scmp.ne.s32.totalorder %s93, %s107
    %p109 = scmp.eq.s32.totalorder %s20, 0
    %p110 = por %p108, %p109
    %s112 = sadd.s32 %s111, 1
    %p115 = scmp.eq.s32.totalorder %s14, 1
    %p116 = scmp.ne.s32.totalorder %s111, %s113
    %p117 = scmp.eq.s32.totalorder %s14, 0
    %p118 = por %p116, %p117
    %p119 = scmp.ne.s32.totalorder %s111, %s113
    %p120 = scmp.eq.s32.totalorder %s19, 1
    %p121 = por %p119, %p120
    %p122 = scmp.ne.s32.totalorder %s113, %s114
    %p123 = scmp.eq.s32.totalorder %s19, 0
    %p124 = por %p122, %p123
    %p125 = scmp.ne.s32.totalorder %s113, %s114
    %p126 = scmp.eq.s32.totalorder %s20, 1
    %p127 = por %p125, %p126
    %p129 = scmp.ne.s32.totalorder %s114, %s128
    %p130 = scmp.eq.s32.totalorder %s20, 0
    %p131 = por %p129, %p130
    %s133 = sadd.s32 %s132, 1
    %p136 = scmp.eq.s32.totalorder %s14, 1
    %p137 = scmp.ne.s32.totalorder %s132, %s134
    %p138 = scmp.eq.s32.totalorder %s14, 0
    %p139 = por %p137, %p138
    %p140 = scmp.ne.s32.totalorder %s132, %s134
    %p141 = scmp.eq.s32.totalorder %s19, 1
    %p142 = por %p140, %p141
    %p143 = scmp.ne.s32.totalorder %s134, %s135
    %p144 = scmp.eq.s32.totalorder %s19, 0
    %p145 = por %p143, %p144
    %p146 = scmp.ne.s32.totalorder %s134, %s135
    %p147 = scmp.eq.s32.totalorder %s20, 1
    %p148 = por %p146, %p147
    %p150 = scmp.ne.s32.totalorder %s135, %s149
    %p151 = scmp.eq.s32.totalorder %s20, 0
    %p152 = por %p150, %p151
    %s154 = sadd.s32 %s153, 1
    %p157 = scmp.eq.s32.totalorder %s14, 1
    %p158 = scmp.ne.s32.totalorder %s153, %s155
    %p159 = scmp.eq.s32.totalorder %s14, 0
    %p160 = por %p158, %p159
    %p161 = scmp.ne.s32.totalorder %s153, %s155
    %p162 = scmp.eq.s32.totalorder %s19, 1
    %p163 = por %p161, %p162
    %p164 = scmp.ne.s32.totalorder %s155, %s156
    %p165 = scmp.eq.s32.totalorder %s19, 0
    %p166 = por %p164, %p165
    %p167 = scmp.ne.s32.totalorder %s155, %s156
    %p168 = scmp.eq.s32.totalorder %s20, 1
    %p169 = por %p167, %p168
    %p171 = scmp.ne.s32.totalorder %s156, %s170
    %p172 = scmp.eq.s32.totalorder %s20, 0
    %p173 = por %p171, %p172
    %s174 = ssub.s32 %s14, %s21
    %p175 = scmp.eq.s32.totalorder %s174, 0
    %s177 = sadd.s32 %s176, 1
    %s178 = scalar_select %p175, %s176, %s177
    %p181 = pneg %p175
    %p182 = scmp.eq.s32.totalorder %s14, 1
    %p183 = por %p181, %p182
    %p184 = scmp.ne.s32.totalorder %s176, %s179
    %p185 = scmp.eq.s32.totalorder %s14, 0
    %p186 = por %p184, %p185
    %p187 = scmp.ne.s32.totalorder %s176, %s179
    %p188 = scmp.eq.s32.totalorder %s19, 1
    %p189 = por %p187, %p188
    %p190 = scmp.ne.s32.totalorder %s179, %s180
    %p191 = scmp.eq.s32.totalorder %s19, 0
    %p192 = por %p190, %p191
    %p193 = scmp.ne.s32.totalorder %s179, %s180
    %p194 = scmp.eq.s32.totalorder %s20, 1
    %p195 = por %p193, %p194
    %p197 = scmp.ne.s32.totalorder %s180, %s196
    %p198 = scmp.eq.s32.totalorder %s20, 0
    %p199 = por %p197, %p198
    %p200 = scmp.le.s32.totalorder 1, %s14
    %p201 = scmp.lt.s32.totalorder %s14, 3
    %p202 = pnand %p200, %p201
    %p203 = pneg %p202
    // Predicated region
    $region9: #{a2c_value_forward.1} parent=5 // pred_check
      _
    $region10: #{a2c_value_forward.1} parent=5 // pred_check_branch
      %205 = sbr.rel (%p202) target = $region12
    $region11: #{a2c_value_forward.1} parent=5 // pred_region
      %s206 = ssub.s32 %s14, 1
      // Predicated region
      $region13: #{a2c_value_forward.1} parent=11 // pred_check
        %p207 = pneg %p61
      $region14: #{a2c_value_forward.1} parent=11 // pred_check_branch
        %209 = sbr.rel (%p207) target = $region16
      $region15: #{a2c_value_forward.1} parent=11 // pred_region
        _
      $region16: #{a2c_value_forward.1} parent=11 // pred_fallthru
        _
      // Predicated region
      $region17: #{a2c_value_forward.1} parent=11 // pred_check
        %p210 = pneg %p82
      $region18: #{a2c_value_forward.1} parent=11 // pred_check_branch
        %212 = sbr.rel (%p210) target = $region20
      $region19: #{a2c_value_forward.1} parent=11 // pred_region
        _
      $region20: #{a2c_value_forward.1} parent=11 // pred_fallthru
        _
      // Predicated region
      $region21: #{a2c_value_forward.1} parent=11 // pred_check
        %p213 = pneg %p103
      $region22: #{a2c_value_forward.1} parent=11 // pred_check_branch
        %215 = sbr.rel (%p213) target = $region24
      $region23: #{a2c_value_forward.1} parent=11 // pred_region
        _
      $region24: #{a2c_value_forward.1} parent=11 // pred_fallthru
        _
      // Predicated region
      $region25: #{a2c_value_forward.1} parent=11 // pred_check
        %p216 = pneg %p124
      $region26: #{a2c_value_forward.1} parent=11 // pred_check_branch
        %218 = sbr.rel (%p216) target = $region28
      $region27: #{a2c_value_forward.1} parent=11 // pred_region
        _
      $region28: #{a2c_value_forward.1} parent=11 // pred_fallthru
        _
      // Predicated region
      $region29: #{a2c_value_forward.1} parent=11 // pred_check
        %p219 = pneg %p145
      $region30: #{a2c_value_forward.1} parent=11 // pred_check_branch
        %221 = sbr.rel (%p219) target = $region32
      $region31: #{a2c_value_forward.1} parent=11 // pred_region
        _
      $region32: #{a2c_value_forward.1} parent=11 // pred_fallthru
        _
      // Predicated region
      $region33: #{a2c_value_forward.1} parent=11 // pred_check
        %p222 = pneg %p166
      $region34: #{a2c_value_forward.1} parent=11 // pred_check_branch
        %224 = sbr.rel (%p222) target = $region36
      $region35: #{a2c_value_forward.1} parent=11 // pred_region
        _
      $region36: #{a2c_value_forward.1} parent=11 // pred_fallthru
        _
    $region12: #{a2c_value_forward.1} parent=5 // pred_fallthru
      _
    %p225 = scmp.lt.s32.totalorder %s14, 2
    // Predicated region
    $region37: #{a2c_value_forward.1} parent=5 // pred_check
      %p226 = pneg %p225
    $region38: #{a2c_value_forward.1} parent=5 // pred_check_branch
      %228 = sbr.rel (%p226) target = $region40
    $region39: #{a2c_value_forward.1} parent=5 // pred_region
      // Predicated region
      $region41: #{a2c_value_forward.1} parent=39 // pred_check
        %p229 = pneg %p34
      $region42: #{a2c_value_forward.1} parent=39 // pred_check_branch
        %231 = sbr.rel (%p229) target = $region44
      $region43: #{a2c_value_forward.1} parent=39 // pred_region
        %s232 = smul.u32 16, %s14
        %p233 = scmp.lt.s32.totalorder %s232, 31
        %s234 = scalar_select %p233, %s232, 31
        %s235 = smul.addr %s234, 4
        %s236 = scalar_lea.vmem %s0, %s235
        %s237 = smul.u32 16, %s14
      $region44: #{a2c_value_forward.1} parent=39 // pred_fallthru
        _
    $region40: #{a2c_value_forward.1} parent=5 // pred_fallthru
      _
    %p238 = scmp.le.s32.totalorder 1, %s14
    %p239 = scmp.lt.s32.totalorder %s14, 3
    %p240 = pnand %p238, %p239
    %p241 = pneg %p240
    // Predicated region
    $region45: #{a2c_value_forward.1} parent=5 // pred_check
      _
    $region46: #{a2c_value_forward.1} parent=5 // pred_check_branch
      %243 = sbr.rel (%p240) target = $region48
    $region47: #{a2c_value_forward.1} parent=5 // pred_region
      %s244 = ssub.s32 %s14, 1
      %s245 = smul.u32 16, %s19
      %p246 = scmp.lt.s32.totalorder %s245, 31
      %s247 = scalar_select %p246, %s245, 31
      %s248 = smul.addr %s247, 4
      %s249 = scalar_lea.vmem %s0, %s248
      %p250 = pneg %p40
      %p251 = pneg %p37
      %p252 = pneg %p61
      %p253 = pneg %p58
      %p254 = pneg %p82
      %p255 = pneg %p79
      %p256 = pneg %p103
      %p257 = pneg %p100
      %p258 = pneg %p124
      %p259 = pneg %p121
      %p260 = pneg %p145
      %p261 = pneg %p142
      %p262 = pneg %p166
      %p263 = pneg %p163
      %p264 = pneg %p192
      %p265 = pneg %p189
      %p266 = scmp.lt.s32.totalorder %s19, 1
      %s267 = scalar_select %p266, %s19, 1
      %s268 = scalar_lea.vmem %s7, %s267
      %s269 = smul.u32 16, %s19
      %p270 = scmp.lt.s32.totalorder %s269, 31
      %s271 = scalar_select %p270, %s269, 31
      %s272 = smul.addr %s271, 4
      %s273 = scalar_lea.vmem %s0, %s272
      %s274 = smul.u32 16, %s19
      %p275 = scmp.lt.s32.totalorder %s19, 1
      %s276 = scalar_select %p275, %s19, 1
      %s277 = scalar_lea.vmem %s7, %s276
      %v278 = vld [vmem:[%s273] sm:$0xf]
      %v279 = vld [vmem:[%s273 + $0x4] sm:$0xf]
      %v280 = vld [vmem:[%s273 + $0x8] sm:$0xf]
      %v281 = vld [vmem:[%s273 + $0xc] sm:$0xf]
      %v282 = vld [vmem:[%s273 + $0x10] sm:$0xf]
      %v283 = vld [vmem:[%s273 + $0x14] sm:$0xf]
      %v284 = vld [vmem:[%s273 + $0x18] sm:$0xf]
      %v285 = vld [vmem:[%s273 + $0x1c] sm:$0xf]
      %v286 = vld [vmem:[%s273 + $0x20] sm:$0xf]
      %v287 = vld [vmem:[%s273 + $0x24] sm:$0xf]
      %v288 = vld [vmem:[%s273 + $0x28] sm:$0xf]
      %v289 = vld [vmem:[%s273 + $0x2c] sm:$0xf]
      %v290 = vld [vmem:[%s273 + $0x30] sm:$0xf]
      %v291 = vld [vmem:[%s273 + $0x34] sm:$0xf]
      %v292 = vld [vmem:[%s273 + $0x38] sm:$0xf]
      %v293 = vld [vmem:[%s273 + $0x3c] sm:$0xf]
      %v294 = vunpack.c.l.bf16 %v278
      %v295 = vunpack.c.l.bf16 %v279
      %v296 = vunpack.c.l.bf16 %v280
      %v297 = vunpack.c.l.bf16 %v281
      %v298 = vunpack.c.l.bf16 %v282
      %v299 = vunpack.c.l.bf16 %v283
      %v300 = vunpack.c.l.bf16 %v284
      %v301 = vunpack.c.l.bf16 %v285
      %v302 = vunpack.c.l.bf16 %v286
      %v303 = vunpack.c.l.bf16 %v287
      %v304 = vunpack.c.l.bf16 %v288
      %v305 = vunpack.c.l.bf16 %v289
      %v306 = vunpack.c.l.bf16 %v290
      %v307 = vunpack.c.l.bf16 %v291
      %v308 = vunpack.c.l.bf16 %v292
      %v309 = vunpack.c.l.bf16 %v293
      %v310 = vld [vmem:[%s1] sm:$0xf]
      %v311 = vld [vmem:[%s2] sm:$0x1]
      %v313 = vperm.slane %v311, 0
      %vm315 = vcmask 31744
      %v317 = vsel %vm315, %v294, 0
      %v320 = vsel %vm315, %v295, 0
      %v323 = vsel %vm315, %v296, 0
      %v326 = vsel %vm315, %v297, 0
      %v329 = vsel %vm315, %v298, 0
      %v332 = vsel %vm315, %v299, 0
      %v335 = vsel %vm315, %v300, 0
      %v338 = vsel %vm315, %v301, 0
      %v341 = vsel %vm315, %v302, 0
      %v344 = vsel %vm315, %v303, 0
      %v347 = vsel %vm315, %v304, 0
      %v350 = vsel %vm315, %v305, 0
      %v353 = vsel %vm315, %v306, 0
      %v356 = vsel %vm315, %v307, 0
      %v359 = vsel %vm315, %v308, 0
      %v362 = vsel %vm315, %v309, 0
      %vm364 = vcmask 1043456
      %v366 = vsel %vm364, %v310, 0
      %368 = vmatpush.msra.mxu0 0.0
      %369 = vmatpush.msra.mxu0 0.0
      %370 = vmatpush.msra.mxu0 0.0
      %371 = vmatpush.msra.mxu0 0.0
      %372 = vmatpush.msra.mxu0 0.0
      %373 = vmatpush.msra.mxu0 0.0
      %374 = vmatpush.msra.mxu0 0.0
      %375 = vmatpush.msra.mxu0 0.0
      %376 = vmatpush.msra.mxu0 0.0
      %377 = vmatpush.msra.mxu0 0.0
      %378 = vmatpush.msra.mxu0 0.0
      %379 = vmatpush.msra.mxu0 0.0
      %380 = vmatpush.msra.mxu0 0.0
      %381 = vmatpush.msra.mxu0 0.0
      %382 = vmatpush.msra.mxu0 0.0
      %383 = vmatpush.msra.mxu0 %v366
      %384 = vmatmul.f32.gmra.mxu0 %v317
      %v385 = vpop.f32.mrf.mxu0
      %v386 = vadd.f32 %v313, %v385
      %387 = vmatmul.f32.gmra.mxu0 %v320
      %v388 = vpop.f32.mrf.mxu0
      %v389 = vadd.f32 %v313, %v388
      %390 = vmatmul.f32.gmra.mxu0 %v323
      %v391 = vpop.f32.mrf.mxu0
      %v392 = vadd.f32 %v313, %v391
      %393 = vmatmul.f32.gmra.mxu0 %v326
      %v394 = vpop.f32.mrf.mxu0
      %v395 = vadd.f32 %v313, %v394
      %396 = vmatmul.f32.gmra.mxu0 %v329
      %v397 = vpop.f32.mrf.mxu0
      %v398 = vadd.f32 %v313, %v397
      %399 = vmatmul.f32.gmra.mxu0 %v332
      %v400 = vpop.f32.mrf.mxu0
      %v401 = vadd.f32 %v313, %v400
      %402 = vmatmul.f32.gmra.mxu0 %v335
      %v403 = vpop.f32.mrf.mxu0
      %v404 = vadd.f32 %v313, %v403
      %405 = vmatmul.f32.gmra.mxu0 %v338
      %v406 = vpop.f32.mrf.mxu0
      %v407 = vadd.f32 %v313, %v406
      %408 = vmatmul.f32.gmra.mxu0 %v341
      %v409 = vpop.f32.mrf.mxu0
      %v410 = vadd.f32 %v313, %v409
      %411 = vmatmul.f32.gmra.mxu0 %v344
      %v412 = vpop.f32.mrf.mxu0
      %v413 = vadd.f32 %v313, %v412
      %414 = vmatmul.f32.gmra.mxu0 %v347
      %v415 = vpop.f32.mrf.mxu0
      %v416 = vadd.f32 %v313, %v415
      %417 = vmatmul.f32.gmra.mxu0 %v350
      %v418 = vpop.f32.mrf.mxu0
      %v419 = vadd.f32 %v313, %v418
      %420 = vmatmul.f32.gmra.mxu0 %v353
      %v421 = vpop.f32.mrf.mxu0
      %v422 = vadd.f32 %v313, %v421
      %423 = vmatmul.f32.gmra.mxu0 %v356
      %v424 = vpop.f32.mrf.mxu0
      %v425 = vadd.f32 %v313, %v424
      %426 = vmatmul.f32.gmra.mxu0 %v359
      %v427 = vpop.f32.mrf.mxu0
      %v428 = vadd.f32 %v313, %v427
      %429 = vmatmul.f32.gmra.mxu0 %v362
      %v430 = vpop.f32.mrf.mxu0
      %v431 = vadd.f32 %v313, %v430
      %432 = vdwg.mxu0
      %v433 = vmax.f32 %v386, 0.0
      %v434 = vmax.f32 %v389, 0.0
      %v435 = vmax.f32 %v392, 0.0
      %v436 = vmax.f32 %v395, 0.0
      %v437 = vmax.f32 %v398, 0.0
      %v438 = vmax.f32 %v401, 0.0
      %v439 = vmax.f32 %v404, 0.0
      %v440 = vmax.f32 %v407, 0.0
      %v441 = vmax.f32 %v410, 0.0
      %v442 = vmax.f32 %v413, 0.0
      %v443 = vmax.f32 %v416, 0.0
      %v444 = vmax.f32 %v419, 0.0
      %v445 = vmax.f32 %v422, 0.0
      %v446 = vmax.f32 %v425, 0.0
      %v447 = vmax.f32 %v428, 0.0
      %v448 = vmax.f32 %v431, 0.0
      %v449 = vld [vmem:[%s3] sm:$0xff]
      %v450 = vld [vmem:[%s3 + $0x8] sm:$0xff]
      %v451 = vld [vmem:[%s3 + $0x10] sm:$0xff]
      %v452 = vld [vmem:[%s3 + $0x18] sm:$0xff]
      %v453 = vld [vmem:[%s4] sm:$0x1]
      %v455 = vperm.slane %v453, 0
      %vm457 = vcmask 261120
      %v459 = vsel %vm457, %v433, 0
      %v462 = vsel %vm457, %v434, 0
      %v465 = vsel %vm457, %v435, 0
      %v468 = vsel %vm457, %v436, 0
      %v471 = vsel %vm457, %v437, 0
      %v474 = vsel %vm457, %v438, 0
      %v477 = vsel %vm457, %v439, 0
      %v480 = vsel %vm457, %v440, 0
      %v483 = vsel %vm457, %v441, 0
      %v486 = vsel %vm457, %v442, 0
      %v489 = vsel %vm457, %v443, 0
      %v492 = vsel %vm457, %v444, 0
      %v495 = vsel %vm457, %v445, 0
      %v498 = vsel %vm457, %v446, 0
      %v501 = vsel %vm457, %v447, 0
      %v504 = vsel %vm457, %v448, 0
      %506 = vmatpush.msra.mxu0 0.0
      %507 = vmatpush.msra.mxu0 0.0
      %508 = vmatpush.msra.mxu0 0.0
      %509 = vmatpush.msra.mxu0 0.0
      %510 = vmatpush.msra.mxu0 0.0
      %511 = vmatpush.msra.mxu0 0.0
      %512 = vmatpush.msra.mxu0 0.0
      %513 = vmatpush.msra.mxu0 0.0
      %514 = vmatpush.msra.mxu0 0.0
      %515 = vmatpush.msra.mxu0 0.0
      %516 = vmatpush.msra.mxu0 0.0
      %517 = vmatpush.msra.mxu0 0.0
      %518 = vmatpush.msra.mxu0 %v452
      %519 = vmatpush.msra.mxu0 %v451
      %520 = vmatpush.msra.mxu0 %v450
      %521 = vmatpush.msra.mxu0 %v449
      %522 = vmatmul.f32.gmra.mxu0 %v459
      %v523 = vpop.f32.mrf.mxu0
      %v524 = vadd.f32 %v455, %v523
      %525 = vmatmul.f32.gmra.mxu0 %v462
      %v526 = vpop.f32.mrf.mxu0
      %v527 = vadd.f32 %v455, %v526
      %528 = vmatmul.f32.gmra.mxu0 %v465
      %v529 = vpop.f32.mrf.mxu0
      %v530 = vadd.f32 %v455, %v529
      %531 = vmatmul.f32.gmra.mxu0 %v468
      %v532 = vpop.f32.mrf.mxu0
      %v533 = vadd.f32 %v455, %v532
      %534 = vmatmul.f32.gmra.mxu0 %v471
      %v535 = vpop.f32.mrf.mxu0
      %v536 = vadd.f32 %v455, %v535
      %537 = vmatmul.f32.gmra.mxu0 %v474
      %v538 = vpop.f32.mrf.mxu0
      %v539 = vadd.f32 %v455, %v538
      %540 = vmatmul.f32.gmra.mxu0 %v477
      %v541 = vpop.f32.mrf.mxu0
      %v542 = vadd.f32 %v455, %v541
      %543 = vmatmul.f32.gmra.mxu0 %v480
      %v544 = vpop.f32.mrf.mxu0
      %v545 = vadd.f32 %v455, %v544
      %546 = vmatmul.f32.gmra.mxu0 %v483
      %v547 = vpop.f32.mrf.mxu0
      %v548 = vadd.f32 %v455, %v547
      %549 = vmatmul.f32.gmra.mxu0 %v486
      %v550 = vpop.f32.mrf.mxu0
      %v551 = vadd.f32 %v455, %v550
      %552 = vmatmul.f32.gmra.mxu0 %v489
      %v553 = vpop.f32.mrf.mxu0
      %v554 = vadd.f32 %v455, %v553
      %555 = vmatmul.f32.gmra.mxu0 %v492
      %v556 = vpop.f32.mrf.mxu0
      %v557 = vadd.f32 %v455, %v556
      %558 = vmatmul.f32.gmra.mxu0 %v495
      %v559 = vpop.f32.mrf.mxu0
      %v560 = vadd.f32 %v455, %v559
      %561 = vmatmul.f32.gmra.mxu0 %v498
      %v562 = vpop.f32.mrf.mxu0
      %v563 = vadd.f32 %v455, %v562
      %564 = vmatmul.f32.gmra.mxu0 %v501
      %v565 = vpop.f32.mrf.mxu0
      %v566 = vadd.f32 %v455, %v565
      %567 = vmatmul.f32.gmra.mxu0 %v504
      %v568 = vpop.f32.mrf.mxu0
      %v569 = vadd.f32 %v455, %v568
      %570 = vdwg.mxu0
      %v571 = vmax.f32 %v524, 0.0
      %v572 = vmax.f32 %v527, 0.0
      %v573 = vmax.f32 %v530, 0.0
      %v574 = vmax.f32 %v533, 0.0
      %v575 = vmax.f32 %v536, 0.0
      %v576 = vmax.f32 %v539, 0.0
      %v577 = vmax.f32 %v542, 0.0
      %v578 = vmax.f32 %v545, 0.0
      %v579 = vmax.f32 %v548, 0.0
      %v580 = vmax.f32 %v551, 0.0
      %v581 = vmax.f32 %v554, 0.0
      %v582 = vmax.f32 %v557, 0.0
      %v583 = vmax.f32 %v560, 0.0
      %v584 = vmax.f32 %v563, 0.0
      %v585 = vmax.f32 %v566, 0.0
      %v586 = vmax.f32 %v569, 0.0
      %v587 = vld [vmem:[%s5] sm:$0x1]
      %s588 = sld [smem:[#allocation2]]
      %v589 = vstv %s588
      %v591 = vsel %vm457, %v587, 0
      %v594 = vsel %vm457, %v571, 0
      %v597 = vsel %vm457, %v572, 0
      %v600 = vsel %vm457, %v573, 0
      %v603 = vsel %vm457, %v574, 0
      %v606 = vsel %vm457, %v575, 0
      %v609 = vsel %vm457, %v576, 0
      %v612 = vsel %vm457, %v577, 0
      %v615 = vsel %vm457, %v578, 0
      %v618 = vsel %vm457, %v579, 0
      %v621 = vsel %vm457, %v580, 0
      %v624 = vsel %vm457, %v581, 0
      %v627 = vsel %vm457, %v582, 0
      %v630 = vsel %vm457, %v583, 0
      %v633 = vsel %vm457, %v584, 0
      %v636 = vsel %vm457, %v585, 0
      %v639 = vsel %vm457, %v586, 0
      %641 = vmatpush.xpose.msra.mxu0 %v639
      %642 = vmatpush.xpose.msra.mxu0 %v636
      %643 = vmatpush.xpose.msra.mxu0 %v633
      %644 = vmatpush.xpose.msra.mxu0 %v630
      %645 = vmatpush.xpose.msra.mxu0 %v627
      %646 = vmatpush.xpose.msra.mxu0 %v624
      %647 = vmatpush.xpose.msra.mxu0 %v621
      %648 = vmatpush.xpose.msra.mxu0 %v618
      %649 = vmatpush.xpose.msra.mxu0 %v615
      %650 = vmatpush.xpose.msra.mxu0 %v612
      %651 = vmatpush.xpose.msra.mxu0 %v609
      %652 = vmatpush.xpose.msra.mxu0 %v606
      %653 = vmatpush.xpose.msra.mxu0 %v603
      %654 = vmatpush.xpose.msra.mxu0 %v600
      %655 = vmatpush.xpose.msra.mxu0 %v597
      %656 = vmatpush.xpose.msra.mxu0 %v594
      %657 = vmatmul.f32.gmra.mxu0 %v591
      %v658 = vpop.f32.mrf.mxu0
      %v659 = vadd.f32 %v589, %v658
      %660 = vdwg.mxu0
      %661 = vst [vmem:[%s277] sm:$0x1] %v659
      %p662 = scmp.lt.s32.totalorder %s19, 1
      %s663 = scalar_select %p662, %s19, 1
      %s664 = scalar_lea.vmem %s7, %s663
      // Predicated region
      $region49: #{a2c_value_forward.1} parent=47 // pred_check
        %p665 = pneg %p189
      $region50: #{a2c_value_forward.1} parent=47 // pred_check_branch
        %667 = sbr.rel (%p665) target = $region52
      $region51: #{a2c_value_forward.1} parent=47 // pred_region
        _
      $region52: #{a2c_value_forward.1} parent=47 // pred_fallthru
        _
    $region48: #{a2c_value_forward.1} parent=5 // pred_fallthru
      _
    %p668 = scmp.le.s32.totalorder 2, %s14
    // Predicated region
    $region53: #{a2c_value_forward.1} parent=5 // pred_check
      %p669 = pneg %p668
    $region54: #{a2c_value_forward.1} parent=5 // pred_check_branch
      %671 = sbr.rel (%p669) target = $region56
    $region55: #{a2c_value_forward.1} parent=5 // pred_region
      %s672 = ssub.s32 %s14, 2
      // Predicated region
      $region57: #{a2c_value_forward.1} parent=55 // pred_check
        %p673 = pneg %p195
      $region58: #{a2c_value_forward.1} parent=55 // pred_check_branch
        %675 = sbr.rel (%p673) target = $region60
      $region59: #{a2c_value_forward.1} parent=55 // pred_region
        %p676 = scmp.lt.s32.totalorder %s20, 1
        %s677 = scalar_select %p676, %s20, 1
        %s678 = scalar_lea.vmem %s7, %s677
      $region60: #{a2c_value_forward.1} parent=55 // pred_fallthru
        _
    $region56: #{a2c_value_forward.1} parent=5 // pred_fallthru
      _
  $region6: #{a2c_value_forward.1} parent=0 // loop_footer
    %s18 = sadd.s32 1, %s14
  $region7: #{a2c_value_forward.1} parent=0 // loop_footer_branch
    %13 = sbr.rel target = $region3
  $region8: #{a2c_value_forward.1} parent=0 // loop_exit
    _

</llo_original>
